<compile_context>
chip_gen: v7x
topology: tpu7x:2x2x1
jax: 0.10.0
libtpu: 0.0.40
codegen_flags: <defaults>
</compile_context>

<pallas_src>
from math import ceil

import jax
import jax.numpy as jnp
from jax.experimental import pallas as pl
from jax.experimental.pallas import tpu as pltpu

_LOG2 = 0.6931471805599453


def _round_up(a, b):
    return (a + b - 1) // b * b


def _ssp(v):
    # shifted softplus, numerically stable; kept in f32 (VPU + EUP).  ssp(0) == 0,
    # so zero feature-padding stays exactly zero through the whole network.
    # TODO(synk): on v6e/v7x the exp/log1p tail could run in bf16 (bf16 EUP) since
    #             the result immediately feeds a bf16 MXU operand; kept f32 here
    #             so the same kernel is exact-enough on v5e.
    return jnp.maximum(v, 0.0) + jnp.log1p(jnp.exp(-jnp.abs(v))) - _LOG2


def _dot_bf16(a, w_ref):
    # bf16 MXU operands (weights are pre-cast in the wrapper), f32 accumulation.
    return jnp.dot(a.astype(jnp.bfloat16), w_ref[...],
                   preferred_element_type=jnp.float32)


def _res(v, w1_ref, b1, w2_ref, b2):
    t = _dot_bf16(_ssp(v), w1_ref) + b1
    t = _dot_bf16(_ssp(t), w2_ref) + b2
    return v + t


# --------------------------------------------------------------------------------
# Kernel 1: per-node "diff" projection  y = W_diff * ssp(x) + b_diff  (tiled, parallel)
# Output is stored in bf16: it is only ever consumed as a bf16 MXU operand in the
# edge kernel, and halving its dtype halves the edge path's dominant HBM stream.
# --------------------------------------------------------------------------------
def _proj_kernel(x_ref, w_diff_ref, b_diff_ref, y_ref):
    ax = _ssp(x_ref[...])
    y_ref[...] = (_dot_bf16(ax, w_diff_ref) + b_diff_ref[...]).astype(jnp.bfloat16)


# --------------------------------------------------------------------------------
# Kernel 2: edge messages + per-node-tile scatter accumulation
#   grid = (edge chunks,), edges pre-sorted by target node and bucketed per
#   TN_edge-node tile; the chunk->tile table is scalar-prefetched and drives the
#   output BlockSpec (revisited across the contiguous chunks of a tile).
# --------------------------------------------------------------------------------
def _edge_kernel(chunk_tile_ref, chunk_first_ref,        # scalar prefetch (SMEM)
                 tloc_ref, rbf_ref, yedge_ref, w_g_ref,  # VMEM inputs
                 aggr_ref):                              # VMEM output (revisited)
    c = pl.program_id(0)
    tn = aggr_ref.shape[0]
    te = tloc_ref.shape[1]

    @pl.when(chunk_first_ref[c] == 1)
    def _():
        aggr_ref[...] = jnp.zeros_like(aggr_ref)

    # G(rbf): (TE, Kp) x (Kp, Fp) on the MXU (bf16 operands, f32 accumulate)
    g = jnp.dot(rbf_ref[...], w_g_ref[...], preferred_element_type=jnp.float32)
    # message product in f32, cast once to bf16 for the scatter matmul operand
    msg = (g * yedge_ref[...].astype(jnp.float32)).astype(jnp.bfloat16)

    # local scatter-add within the (small) node tile via a (TN_edge, TE) one-hot
    # matmul built directly in bf16; dummy/padding edges carry rbf == 0 so their
    # message is exactly zero.
    tloc = tloc_ref[0:1, :]                              # (1, TE) local target rows
    row_ids = jax.lax.broadcasted_iota(jnp.int32, (tn, te), 0)
    onehot = (row_ids == tloc).astype(jnp.bfloat16)
    aggr_ref[...] += jnp.dot(onehot, msg, preferred_element_type=jnp.float32)


# --------------------------------------------------------------------------------
# Kernel 3: everything that is purely per-node (tiled, parallel).  The final
# read-out matmul (F/2 -> n_output) is intentionally NOT done here: n_output is
# tiny and would have to be padded to 128 lanes, so it is left to XLA on the
# sliced `embed` output.
# --------------------------------------------------------------------------------
def _node_kernel(x_ref, aggr_ref,
                 w_same_ref, b_same_ref,
                 ri_w1_ref, ri_b1_ref, ri_w2_ref, ri_b2_ref,
                 lin_last_w_ref, lin_last_b_ref, gate_ref,
                 ra_w1_ref, ra_b1_ref, ra_w2_ref, ra_b2_ref,
                 ro_w1_ref, ro_b1_ref, ro_w2_ref, ro_b2_ref,
                 rd_w_ref, rd_b_ref,
                 vi_ref, embed_ref):
    x = x_ref[...]
    ax = _ssp(x)

    # message pass: same-atom branch + aggregated neighbor messages
    msged = _dot_bf16(ax, w_same_ref) + b_same_ref[...] + aggr_ref[...]

    # interaction residual stack + gated skip connection
    t = _res(msged, ri_w1_ref, ri_b1_ref[...], ri_w2_ref, ri_b2_ref[...])
    v = _dot_bf16(_ssp(t), lin_last_w_ref) + lin_last_b_ref[...]
    interacted = v + x * gate_ref[...]

    # atomic residual layer(s)
    tmp_res = _res(interacted, ra_w1_ref, ra_b1_ref[...], ra_w2_ref, ra_b2_ref[...])
    vi_ref[...] = tmp_res

    # OutputLayer: residual -> read_out0 (F -> ceil(F/2)) -> ssp -> (last linear in XLA)
    o = _res(tmp_res, ro_w1_ref, ro_b1_ref[...], ro_w2_ref, ro_b2_ref[...])
    o = _dot_bf16(_ssp(o), rd_w_ref) + rd_b_ref[...]
    embed_ref[...] = _ssp(o)


# --------------------------------------------------------------------------------
# wrapper-side plumbing
# --------------------------------------------------------------------------------
def _pad2(a, rows, cols, dtype=None):
    out = jnp.pad(a, ((0, rows - a.shape[0]), (0, cols - a.shape[1])))
    return out if dtype is None else out.astype(dtype)


def _prep_params(params, Fp, Kp, F2p):
    bf, f32 = jnp.bfloat16, jnp.float32
    p = {
        "w_diff": _pad2(params["w_diff"], Fp, Fp, bf),
        "b_diff": _pad2(params["b_diff"], 1, Fp, f32),
        "w_same": _pad2(params["w_same"], Fp, Fp, bf),
        "b_same": _pad2(params["b_same"], 1, Fp, f32),
        "w_g": _pad2(params["w_g"], Kp, Fp, bf),
        "lin_last_w": _pad2(params["lin_last_w"], Fp, Fp, bf),
        "lin_last_b": _pad2(params["lin_last_b"], 1, Fp, f32),
        "gate": _pad2(params["gate"], 1, Fp, f32),
        "rd_w": _pad2(params["rd_w"], Fp, F2p, bf),
        "rd_b": _pad2(params["rd_b"], 1, F2p, f32),
    }
    for n in ("ri", "ra", "ro"):
        p[f"{n}_w1"] = _pad2(params[f"{n}_w1"], Fp, Fp, bf)
        p[f"{n}_b1"] = _pad2(params[f"{n}_b1"], 1, Fp, f32)
        p[f"{n}_w2"] = _pad2(params[f"{n}_w2"], Fp, Fp, bf)
        p[f"{n}_b2"] = _pad2(params[f"{n}_b2"], 1, Fp, f32)
    return p


_DENSE_NAMES = [
    "w_same", "b_same",
    "ri_w1", "ri_b1", "ri_w2", "ri_b2",
    "lin_last_w", "lin_last_b", "gate",
    "ra_w1", "ra_b1", "ra_w2", "ra_b2",
    "ro_w1", "ro_b1", "ro_w2", "ro_b2",
    "rd_w", "rd_b",
]


def build_edge_layout(edge_index, Np, TNE, TE):
    """Edge-index-only layout (cacheable across forward passes when edge_index is
    static): sort edges by target node, bucket per TNE-node tile, pad each bucket
    to a whole number of TE-edge chunks, and derive the chunk->tile table that
    drives the edge kernel's output BlockSpec."""
    E = edge_index.shape[1]
    NT_edge = Np // TNE

    src = edge_index[0].astype(jnp.int32)
    tgt = edge_index[1].astype(jnp.int32)
    perm = jnp.argsort(tgt)
    src_s, tgt_s = src[perm], tgt[perm]

    tile_of_edge = tgt_s // TNE
    counts = jnp.bincount(tile_of_edge, length=NT_edge)
    padded_counts = jnp.maximum((counts + TE - 1) // TE, 1) * TE     # >=1 chunk / tile
    offsets = jnp.concatenate([jnp.zeros((1,), counts.dtype),
                               jnp.cumsum(padded_counts)[:-1]])
    tile_first_edge = jnp.concatenate([jnp.zeros((1,), counts.dtype),
                                       jnp.cumsum(counts)[:-1]])
    pos = offsets[tile_of_edge] + (jnp.arange(E, dtype=counts.dtype)
                                   - tile_first_edge[tile_of_edge])

    E_stat = _round_up(E, TE) + NT_edge * TE     # static upper bound on padded edges
    C_stat = E_stat // TE

    src_pad = jnp.zeros((E_stat,), jnp.int32).at[pos].set(src_s)
    tloc_pad = jnp.zeros((E_stat,), jnp.int32).at[pos].set(tgt_s - tile_of_edge * TNE)

    ends = jnp.cumsum(padded_counts)
    chunk_starts = jnp.arange(C_stat, dtype=ends.dtype) * TE
    chunk_tile = jnp.minimum(jnp.searchsorted(ends, chunk_starts, side="right"),
                             NT_edge - 1).astype(jnp.int32)
    chunk_first = jnp.concatenate(
        [jnp.ones((1,), jnp.int32),
         (chunk_tile[1:] != chunk_tile[:-1]).astype(jnp.int32)])

    # replicate per-chunk local-target rows across 8 sublanes -> clean (8, TE) blocks
    tloc_rep = jnp.broadcast_to(tloc_pad.reshape(C_stat, 1, TE),
                                (C_stat, 8, TE)).reshape(C_stat * 8, TE)

    return dict(perm=perm, pos=pos, src_pad=src_pad, tloc_rep=tloc_rep,
                chunk_tile=chunk_tile, chunk_first=chunk_first,
                E_stat=E_stat, C_stat=C_stat, TNE=TNE, TE=TE, Np=Np)


def phys_module_forward(input_dict, params, *, tile_n=512, tile_e=512,
                        tile_n_edge=128, edge_layout=None):
    x = input_dict["vi"]                    # (N, F) float32
    edge_index = input_dict["edge_index"]   # (2, E) int32 (row0=src j, row1=tgt i)
    rbf = input_dict["edge_attr"]["rbf"]    # (E, K) float32

    N, F = x.shape
    E, K = rbf.shape
    F2 = params["rd_w"].shape[1]

    # lane-dense padded feature dims (zero padding is exact: ssp(0)==0, padded
    # weight rows/cols and biases are zero)
    Fp, Kp, F2p = (_round_up(d, 128) for d in (F, K, F2))

    # node / edge tile sizes (sublane multiples of 8)
    TN = tile_n if N >= tile_n else _round_up(N, 8)
    Np = _round_up(N, TN)
    NT = Np // TN
    TE = tile_e if E >= tile_e else _round_up(E, 8)
    # edge-side node tile (aggr output block): smaller than TN to shrink the
    # one-hot scatter matmul; must divide TN (so it also divides Np).
    TNE = tile_n_edge
    if TNE > TN or TN % TNE != 0 or TNE % 8 != 0:
        TNE = TN

    wp = _prep_params(params, Fp, Kp, F2p)
    x_pad = _pad2(x, Np, Fp, jnp.float32)

    # ---- edge layout (pure function of edge_index + tiling; cache it when
    #      edge_index is static across forward passes)
    if edge_layout is None:
        edge_layout = build_edge_layout(edge_index, Np, TNE, TE)
    lay = edge_layout
    E_stat, C_stat = lay["E_stat"], lay["C_stat"]

    # per-call rbf scatter into the padded/sorted edge layout (bf16 MXU operand)
    rbf_pad = jnp.zeros((E_stat, Kp), jnp.bfloat16).at[lay["pos"]].set(
        _pad2(rbf[lay["perm"]], E, Kp, jnp.bfloat16))

    # ---- kernel 1: per-node diff projection y = W_diff*ssp(x) + b_diff (bf16 out)
    y = pl.pallas_call(
        _proj_kernel,
        grid=(NT,),
        in_specs=[
            pl.BlockSpec((TN, Fp), lambda i: (i, 0)),
            pl.BlockSpec((Fp, Fp), lambda i: (0, 0)),
            pl.BlockSpec((1, Fp), lambda i: (0, 0)),
        ],
        out_specs=pl.BlockSpec((TN, Fp), lambda i: (i, 0)),
        out_shape=jax.ShapeDtypeStruct((Np, Fp), jnp.bfloat16),
        compiler_params=pltpu.CompilerParams(dimension_semantics=("parallel",)),
    )(x_pad, wp["w_diff"], wp["b_diff"])

    # gather the per-node projection to edges (bf16; dummy edges point at node 0
    # but carry rbf==0, so their message is exactly zero).
    y_edge = jnp.take(y, lay["src_pad"], axis=0)

    # ---- kernel 2: edge messages + per-tile scatter accumulation
    aggr = pl.pallas_call(
        _edge_kernel,
        grid_spec=pltpu.PrefetchScalarGridSpec(
            num_scalar_prefetch=2,
            grid=(C_stat,),
            in_specs=[
                pl.BlockSpec((8, TE), lambda c, ct, cf: (c, 0)),     # local tgt rows
                pl.BlockSpec((TE, Kp), lambda c, ct, cf: (c, 0)),    # rbf chunk
                pl.BlockSpec((TE, Fp), lambda c, ct, cf: (c, 0)),    # gathered y chunk
                pl.BlockSpec((Kp, Fp), lambda c, ct, cf: (0, 0)),    # w_g (resident)
            ],
            out_specs=pl.BlockSpec((TNE, Fp), lambda c, ct, cf: (ct[c], 0)),
        ),
        out_shape=jax.ShapeDtypeStruct((Np, Fp), jnp.float32),
        compiler_params=pltpu.CompilerParams(dimension_semantics=("arbitrary",)),
    )(lay["chunk_tile"], lay["chunk_first"], lay["tloc_rep"], rbf_pad, y_edge,
      wp["w_g"])

    # ---- kernel 3: per-node dense stack (interaction, residuals, output layer)
    dense_args = [wp[n] for n in _DENSE_NAMES]
    dense_specs = [pl.BlockSpec(a.shape, lambda i: (0, 0)) for a in dense_args]

    vi_p, embed_p = pl.pallas_call(
        _node_kernel,
        grid=(NT,),
        in_specs=[pl.BlockSpec((TN, Fp), lambda i: (i, 0)),
                  pl.BlockSpec((TN, Fp), lambda i: (i, 0))] + dense_specs,
        out_specs=(pl.BlockSpec((TN, Fp), lambda i: (i, 0)),
                   pl.BlockSpec((TN, F2p), lambda i: (i, 0))),
        out_shape=(jax.ShapeDtypeStruct((Np, Fp), jnp.float32),
                   jax.ShapeDtypeStruct((Np, F2p), jnp.float32)),
        compiler_params=pltpu.CompilerParams(dimension_semantics=("parallel",)),
    )(x_pad, aggr, *dense_args)

    embed = embed_p[:N, :F2]
    # final bias-free read-out (F/2 -> n_output): n_output is tiny (1-2), so this is
    # a trivial XLA matmul on the sliced embed instead of a 128-lane-padded kernel
    # output stream (and it is exactly zero when zero_last_linear=True).
    out = embed @ params["lin_w"]

    return {
        "vi": vi_p[:N, :F],
        "out": out,
        "regularization": 0.0,
        "embed_b4_ss": embed,
    }


# --------------------------------------------------------------------------------
# parameters + pure-JAX reference (f32) for correctness checking
# --------------------------------------------------------------------------------
def init_params(key, F, K, n_output, zero_last_linear=True):
    F2 = ceil(F / 2)
    keys = jax.random.split(key, 22)

    def w(k, shape, scale=0.1):
        return scale * jax.random.normal(k, shape, dtype=jnp.float32)

    lin_w = (jnp.zeros((F2, n_output), jnp.float32) if zero_last_linear
             else w(keys[21], (F2, n_output)))
    return dict(
        w_diff=w(keys[0], (F, F)), b_diff=w(keys[1], (1, F)),
        w_same=w(keys[2], (F, F)), b_same=w(keys[3], (1, F)),
        w_g=w(keys[4], (K, F)),                                   # Linear(K, F, bias=False)
        ri_w1=w(keys[5], (F, F)), ri_b1=w(keys[6], (1, F)),
        ri_w2=w(keys[7], (F, F)), ri_b2=w(keys[8], (1, F)),
        lin_last_w=w(keys[9], (F, F)), lin_last_b=w(keys[10], (1, F)),
        gate=jnp.ones((1, F), jnp.float32),                        # u, initialized to ones
        ra_w1=w(keys[11], (F, F)), ra_b1=w(keys[12], (1, F)),
        ra_w2=w(keys[13], (F, F)), ra_b2=w(keys[14], (1, F)),
        ro_w1=w(keys[15], (F, F)), ro_b1=w(keys[16], (1, F)),
        ro_w2=w(keys[17], (F, F)), ro_b2=w(keys[18], (1, F)),
        rd_w=w(keys[19], (F, F2)), rd_b=w(keys[20], (1, F2)),
        lin_w=lin_w,
    )


def reference_forward(input_dict, params):
    x = input_dict["vi"]
    ei = input_dict["edge_index"]
    rbf = input_dict["edge_attr"]["rbf"]
    N = x.shape[0]
    ax = _ssp(x)
    a_xj = ax[ei[0]]
    msg = (a_xj @ params["w_diff"] + params["b_diff"]) * (rbf @ params["w_g"])
    aggr = jax.ops.segment_sum(msg, ei[1], num_segments=N)
    msged = ax @ params["w_same"] + params["b_same"] + aggr

    def res(v, w1, b1, w2, b2):
        t = _ssp(v) @ w1 + b1
        t = _ssp(t) @ w2 + b2
        return v + t

    t = res(msged, params["ri_w1"], params["ri_b1"], params["ri_w2"], params["ri_b2"])
    v = _ssp(t) @ params["lin_last_w"] + params["lin_last_b"]
    interacted = v + x * params["gate"]
    tmp_res = res(interacted, params["ra_w1"], params["ra_b1"], params["ra_w2"], params["ra_b2"])
    o = res(tmp_res, params["ro_w1"], params["ro_b1"], params["ro_w2"], params["ro_b2"])
    o = _ssp(o) @ params["rd_w"] + params["rd_b"]
    embed = _ssp(o)
    out = embed @ params["lin_w"]
    return {"vi": tmp_res, "out": out, "embed_b4_ss": embed}


if __name__ == "__main__":
    # small synthetic shapes consistent with a PhysNet module
    N, F, K, E, n_output = 16, 32, 16, 32, 2

    key = jax.random.PRNGKey(0)
    k1, k2, k3, k4, kp = jax.random.split(key, 5)
    x = jax.random.normal(k1, (N, F), dtype=jnp.float32)
    src = jax.random.randint(k2, (E,), 0, N, dtype=jnp.int32)
    tgt = jax.random.randint(k3, (E,), 0, N, dtype=jnp.int32)
    edge_index = jnp.stack([src, tgt], axis=0)
    rbf = jax.random.uniform(k4, (E, K), dtype=jnp.float32)

    # zero_last_linear=False for the test so the final read-out matmul path is
    # actually validated (module default zeroes lin_w, making `out` trivially 0).
    params = init_params(kp, F, K, n_output, zero_last_linear=False)
    input_dict = {"vi": x, "edge_index": edge_index, "edge_attr": {"rbf": rbf}}

    result = phys_module_forward(input_dict, params)
    jax.block_until_ready(result["vi"])
    jax.block_until_ready(result["out"])
    jax.block_until_ready(result["embed_b4_ss"])

    ref = reference_forward(input_dict, params)
    # bf16 MXU operands / bf16 y round-trip vs f32 reference -> loosened tolerance
    for name in ("vi", "out", "embed_b4_ss"):
        assert jnp.allclose(result[name], ref[name], atol=5e-2, rtol=5e-2), name
    assert result["vi"].shape == (N, F)
    assert result["out"].shape == (N, n_output)
    assert result["embed_b4_ss"].shape == (N, ceil(F / 2))

    print("KERNEL_OK")
</pallas_src>

<mosaic_0001>
module attributes {stable_mosaic.version = 11 : i64} {
  func.func @_proj_kernel(%arg0: i32, %arg1: memref<16x128xf32, #tpu.memory_space<vmem>>, %arg2: memref<128x128xbf16, #tpu.memory_space<vmem>>, %arg3: memref<1x128xf32, #tpu.memory_space<vmem>>, %arg4: memref<16x128xbf16, #tpu.memory_space<vmem>>) attributes {dimension_semantics = [#tpu.dimension_semantics<parallel>], iteration_bounds = array<i64: 1>, scalar_prefetch = 0 : i64, scratch_operands = 0 : i64, tpu.core_type = #tpu.core_type<tc>, window_params = [{transform_indices = @transform_0, window_bounds = array<i64: 16, 128>}, {pipeline_mode = #tpu.pipeline_mode<synchronous>, transform_indices = @transform_1, window_bounds = array<i64: 128, 128>}, {pipeline_mode = #tpu.pipeline_mode<synchronous>, transform_indices = @transform_2, window_bounds = array<i64: 1, 128>}, {transform_indices = @transform_3, window_bounds = array<i64: 16, 128>}]} {
    %c0 = arith.constant 0 : index
    %c0_0 = arith.constant 0 : index
    %0 = vector.load %arg1[%c0, %c0_0] : memref<16x128xf32, #tpu.memory_space<vmem>>, vector<16x128xf32>
    %cst = arith.constant 0.000000e+00 : f32
    %1 = vector.broadcast %cst : f32 to vector<16x128xf32>
    %2 = arith.maximumf %0, %1 : vector<16x128xf32>
    %3 = math.absf %0 : vector<16x128xf32>
    %cst_1 = arith.constant 0.000000e+00 : f32
    %4 = vector.broadcast %cst_1 : f32 to vector<16x128xf32>
    %5 = arith.subf %4, %3 : vector<16x128xf32>
    %6 = math.exp %5 : vector<16x128xf32>
    %7 = math.log1p %6 : vector<16x128xf32>
    %8 = arith.addf %2, %7 : vector<16x128xf32>
    %cst_2 = arith.constant 0.693147182 : f32
    %9 = vector.broadcast %cst_2 : f32 to vector<16x128xf32>
    %10 = arith.subf %8, %9 : vector<16x128xf32>
    %11 = arith.truncf %10 : vector<16x128xf32> to vector<16x128xbf16>
    %c0_3 = arith.constant 0 : index
    %c0_4 = arith.constant 0 : index
    %12 = vector.load %arg2[%c0_3, %c0_4] : memref<128x128xbf16, #tpu.memory_space<vmem>>, vector<128x128xbf16>
    %cst_5 = arith.constant dense<0.000000e+00> : vector<16x128xf32>
    %13 = tpu.matmul %11, %12, %cst_5 {dimension_numbers = #tpu.dot_dimension_numbers<[1], [0], [0], [1], [0, 0, 1, 1], [], []>} : vector<16x128xbf16>, vector<128x128xbf16>, vector<16x128xf32> -> vector<16x128xf32>
    %c0_6 = arith.constant 0 : index
    %c0_7 = arith.constant 0 : index
    %14 = vector.load %arg3[%c0_6, %c0_7] : memref<1x128xf32, #tpu.memory_space<vmem>>, vector<1x128xf32>
    %15 = vector.broadcast %14 : vector<1x128xf32> to vector<16x128xf32>
    %16 = arith.addf %13, %15 : vector<16x128xf32>
    %17 = arith.truncf %16 : vector<16x128xf32> to vector<16x128xbf16>
    %c0_8 = arith.constant 0 : index
    %c0_9 = arith.constant 0 : index
    %18 = vector.load %arg4[%c0_8, %c0_9] : memref<16x128xbf16, #tpu.memory_space<vmem>>, vector<16x128xbf16>
    tpu.vector_store %arg4[%c0_8, %c0_9], %17 {strides = array<i32>} : memref<16x128xbf16, #tpu.memory_space<vmem>>, vector<16x128xbf16>,
    return
  }
  func.func @transform_0(%arg0: i32) -> (i32, i32) {
    %c0_i32 = arith.constant 0 : i32
    %c0_i32_0 = arith.constant 0 : i32
    return %arg0, %c0_i32 : i32, i32
  }
  func.func @transform_1(%arg0: i32) -> (i32, i32) {
    %c0_i32 = arith.constant 0 : i32
    %c0_i32_0 = arith.constant 0 : i32
    %c0_i32_1 = arith.constant 0 : i32
    return %c0_i32, %c0_i32_0 : i32, i32
  }
  func.func @transform_2(%arg0: i32) -> (i32, i32) {
    %c0_i32 = arith.constant 0 : i32
    %c0_i32_0 = arith.constant 0 : i32
    %c0_i32_1 = arith.constant 0 : i32
    return %c0_i32, %c0_i32_0 : i32, i32
  }
  func.func @transform_3(%arg0: i32) -> (i32, i32) {
    %c0_i32 = arith.constant 0 : i32
    %c0_i32_0 = arith.constant 0 : i32
    return %arg0, %c0_i32 : i32, i32
  }
}

</mosaic_0001>

<llo_original>
// kernel: tpu_custom_call.1
$region0: #{tpu_custom_call.1}
  #allocation0 [shape = 'u32[]', space=smem, size = 0x4, offset = 0x4, fixed_abs, tag = 'smem constant byte address 0x4 - core index']
  #allocation1 [shape = 'u32[144,128]{1,0:T(1,128)}', space=vmem, size = 0x12000, scoped, tag = 'internal scratch']
  %s0 = inlined_call_operand.hbm [shape: f32[16,128], index: 0, kind: input, shape index: {}]
  %s1 = inlined_call_operand.hbm [shape: bf16[128,128], index: 1, kind: input, shape index: {}]
  %s2 = inlined_call_operand.vmem [shape: f32[1,128], index: 2, kind: input, shape index: {}]
  %s3 = inlined_call_operand.hbm [shape: bf16[16,128], index: 3, kind: output, shape index: {}]
  %s4 = sld [smem:[#allocation0]]
  $region30: #{tpu_custom_call.1} parent=0
    _
  %s6 = ssub.s32 1, %s4
  %s7 = scalar_select 0, %s6, %s4
  $region1: #{tpu_custom_call.1} parent=0
    #allocation2 [shape = 'u8[8192]{0}', space=vmem, size = 0x2000, scoped, tag = 'input window, operand 0, single buffered']
    #allocation3 [shape = 's32[1]{0}', space=sflag, size = 0x4, scoped, tag = 'scoped memory for tpu_custom_call.1']
    #allocation4 [shape = 's32[1]{0}', space=sflag, size = 0x4, scoped, tag = 'scoped memory for tpu_custom_call.1']
    #allocation5 [shape = 'u8[32768]{0}', space=vmem, size = 0x8000, scoped, tag = 'input window, operand 1, single buffered']
    #allocation6 [shape = 's32[1]{0}', space=sflag, size = 0x4, scoped, tag = 'scoped memory for tpu_custom_call.1']
    #allocation7 [shape = 'u8[4096]{0}', space=vmem, size = 0x1000, scoped, tag = 'output window, operand 0, single buffered']
    %8 = vsyncpa [#allocation3], 0
    %9 = vsyncpa [#allocation6], 0
    %10 = vsyncpa [#allocation4], 0
    // Predicated region
    $region2: #{tpu_custom_call.1} parent=1 // pred_check
      _
    $region3: #{tpu_custom_call.1} parent=1 // pred_check_branch
      %12 = sbr.rel (0) target = $region5
    $region4: #{tpu_custom_call.1} parent=1 // pred_region
      %s14 = ssub.s32 256, 256
      %15 = vsyncadd [#allocation3], %s14
      %s16 = sshll.u32 [#allocation2], 4
      %s17 = int_to_ptr.vmem [resolvable:$true] %s16
      %22 = dma.hbm_to_vmem [thread:$0]  %s0, 256, %s17, [#allocation3], 128, 128, 8
    $region5: #{tpu_custom_call.1} parent=1 // pred_fallthru
      _
    // Predicated region
    $region6: #{tpu_custom_call.1} parent=1 // pred_check
      _
    $region7: #{tpu_custom_call.1} parent=1 // pred_check_branch
      %24 = sbr.rel (0) target = $region9
    $region8: #{tpu_custom_call.1} parent=1 // pred_region
      %s26 = ssub.s32 1024, 1024
      %27 = vsyncadd [#allocation6], %s26
      %s28 = sshll.u32 [#allocation5], 4
      %s29 = int_to_ptr.vmem [resolvable:$true] %s28
      %34 = dma.hbm_to_vmem [thread:$0]  %s1, 1024, %s29, [#allocation6], 64, 64, 4
    $region9: #{tpu_custom_call.1} parent=1 // pred_fallthru
      _
    // Predicated region
    $region10: #{tpu_custom_call.1} parent=1 // pred_check
      _
    $region11: #{tpu_custom_call.1} parent=1 // pred_check_branch
      %36 = sbr.rel (0) target = $region13
    $region12: #{tpu_custom_call.1} parent=1 // pred_region
      _
    $region13: #{tpu_custom_call.1} parent=1 // pred_fallthru
      _
    // Predicated region
    $region14: #{tpu_custom_call.1} parent=1 // pred_check
      _
    $region15: #{tpu_custom_call.1} parent=1 // pred_check_branch
      %38 = sbr.rel (0) target = $region17
    $region16: #{tpu_custom_call.1} parent=1 // pred_region
      %39 = dma.done [#allocation3], 256
    $region17: #{tpu_custom_call.1} parent=1 // pred_fallthru
      _
    // Predicated region
    $region18: #{tpu_custom_call.1} parent=1 // pred_check
      _
    $region19: #{tpu_custom_call.1} parent=1 // pred_check_branch
      %41 = sbr.rel (0) target = $region21
    $region20: #{tpu_custom_call.1} parent=1 // pred_region
      %42 = dma.done [#allocation6], 1024
    $region21: #{tpu_custom_call.1} parent=1 // pred_fallthru
      _
    %v44 = vld [vmem:[#allocation2] sm:$0xff]
    %v45 = vld [vmem:[#allocation2 + $0x8] sm:$0xff]
    %v46 = vmax.f32 %v44, 0.0
    %v47 = vmax.f32 %v45, 0.0
    %v48 = vand.u32 2147483647, %v44
    %v49 = vand.u32 2147483647, %v45
    %v50 = vsub.f32 0.0, %v48
    %v51 = vsub.f32 0.0, %v49
    %v52 = vmul.f32 %v50, 1.442695
    %v53 = vpow.pop %v52
    %v54 = vmul.f32 %v51, 1.442695
    %v55 = vpow.pop %v54
    %v56 = vadd.f32 %v53, 1.0
    %v57 = vlog2.pop %v56
    %v58 = vmul.f32 %v57, 0.6931472
    %v59 = vmul.f32 -0.5, %v53
    %v60 = vadd.f32 %v59, 1.0
    %v61 = vmul.f32 %v60, %v53
    %v62 = vand.u32 2147483647, %v53
    %vm63 = vcmp.lt.f32.partialorder %v62, 0.0004427343
    %v64 = vsel %vm63, %v61, %v58
    %v65 = vadd.f32 %v55, 1.0
    %v66 = vlog2.pop %v65
    %v67 = vmul.f32 %v66, 0.6931472
    %v68 = vmul.f32 -0.5, %v55
    %v69 = vadd.f32 %v68, 1.0
    %v70 = vmul.f32 %v69, %v55
    %v71 = vand.u32 2147483647, %v55
    %vm72 = vcmp.lt.f32.partialorder %v71, 0.0004427343
    %v73 = vsel %vm72, %v70, %v67
    %v74 = vadd.f32 %v46, %v64
    %v75 = vadd.f32 %v47, %v73
    %v76 = vsub.f32 %v74, 0.6931472
    %v77 = vsub.f32 %v75, 0.6931472
    %v78 = vpack.c.bf16 %v77, %v76
    %v79 = vld [vmem:[#allocation5] sm:$0xf]
    %v80 = vld [vmem:[#allocation5 + $0x4] sm:$0xf]
    %v81 = vld [vmem:[#allocation5 + $0x8] sm:$0xf]
    %v82 = vld [vmem:[#allocation5 + $0xc] sm:$0xf]
    %v83 = vld [vmem:[#allocation5 + $0x10] sm:$0xf]
    %v84 = vld [vmem:[#allocation5 + $0x14] sm:$0xf]
    %v85 = vld [vmem:[#allocation5 + $0x18] sm:$0xf]
    %v86 = vld [vmem:[#allocation5 + $0x1c] sm:$0xf]
    %v87 = vld [vmem:[#allocation5 + $0x20] sm:$0xf]
    %v88 = vld [vmem:[#allocation5 + $0x24] sm:$0xf]
    %v89 = vld [vmem:[#allocation5 + $0x28] sm:$0xf]
    %v90 = vld [vmem:[#allocation5 + $0x2c] sm:$0xf]
    %v91 = vld [vmem:[#allocation5 + $0x30] sm:$0xf]
    %v92 = vld [vmem:[#allocation5 + $0x34] sm:$0xf]
    %v93 = vld [vmem:[#allocation5 + $0x38] sm:$0xf]
    %v94 = vld [vmem:[#allocation5 + $0x3c] sm:$0xf]
    %v95 = vld [vmem:[%s2] sm:$0x1]
    %v97 = vlaneseq
    %v98 = vshrl.u32 %v97, 7
    %v99 = vsub.s32 0, %v98
    %v100 = vrot.slane %v95, %v99
    %v118 = vunpack.c.l.b16 %v79
    %v119 = vunpack.c.l.b16 %v80
    %v120 = vunpack.c.l.b16 %v81
    %v121 = vunpack.c.l.b16 %v82
    %v122 = vunpack.c.l.b16 %v83
    %v123 = vunpack.c.l.b16 %v84
    %v124 = vunpack.c.l.b16 %v85
    %v125 = vunpack.c.l.b16 %v86
    %v126 = vunpack.c.l.b16 %v87
    %v127 = vunpack.c.l.b16 %v88
    %v128 = vunpack.c.l.b16 %v89
    %v129 = vunpack.c.l.b16 %v90
    %v130 = vunpack.c.l.b16 %v91
    %v131 = vunpack.c.l.b16 %v92
    %v132 = vunpack.c.l.b16 %v93
    %v133 = vunpack.c.l.b16 %v94
    %v134 = vpack.c.b16 %v119, %v118
    %v135 = vpack.c.b16 %v121, %v120
    %v136 = vpack.c.b16 %v123, %v122
    %v137 = vpack.c.b16 %v125, %v124
    %v138 = vpack.c.b16 %v127, %v126
    %v139 = vpack.c.b16 %v129, %v128
    %v140 = vpack.c.b16 %v131, %v130
    %v141 = vpack.c.b16 %v133, %v132
    %150 = vmatprep.subr.bf16.mxu0 0
    %151 = vmatpush1.bf16.msra.mxu0 %v134
    %152 = vmatprep.subr.bf16.mxu0 0
    %153 = vmatpush1.bf16.msra.mxu0 %v135
    %154 = vmatprep.subr.bf16.mxu0 0
    %155 = vmatpush1.bf16.msra.mxu0 %v136
    %156 = vmatprep.subr.bf16.mxu0 0
    %157 = vmatpush1.bf16.msra.mxu0 %v137
    %158 = vmatprep.subr.bf16.mxu0 0
    %159 = vmatpush1.bf16.msra.mxu0 %v138
    %160 = vmatprep.subr.bf16.mxu0 0
    %161 = vmatpush1.bf16.msra.mxu0 %v139
    %162 = vmatprep.subr.bf16.mxu0 0
    %163 = vmatpush1.bf16.msra.mxu0 %v140
    %164 = vmatprep.subr.bf16.mxu0 0
    %165 = vmatpush1.bf16.msra.mxu0 %v141
    %166 = vmatprep.subr.bf16.mxu0 0
    %167 = vmatpush1.bf16.msra.mxu0 0
    %168 = vmatprep.subr.bf16.mxu0 0
    %169 = vmatpush1.bf16.msra.mxu0 0
    %170 = vmatprep.subr.bf16.mxu0 0
    %171 = vmatpush1.bf16.msra.mxu0 0
    %172 = vmatprep.subr.bf16.mxu0 0
    %173 = vmatpush1.bf16.msra.mxu0 0
    %174 = vmatprep.subr.bf16.mxu0 0
    %175 = vmatpush1.bf16.msra.mxu0 0
    %176 = vmatprep.subr.bf16.mxu0 0
    %177 = vmatpush1.bf16.msra.mxu0 0
    %178 = vmatprep.subr.bf16.mxu0 0
    %179 = vmatpush1.bf16.msra.mxu0 0
    %180 = vmatprep.subr.bf16.mxu0 0
    %181 = vmatpush1.bf16.msra.mxu0 0
    %182 = vmatprep.mubr.bf16.mxu0 0
    %183 = vmatmul.mubr.bf16.gmra.mrb[0].mxu0 %v78
    %v184 = vpop.f32.mrb[0].mxu0
    %v185 = vadd.f32 %v100, %v184
    %v186 = vpop.f32.mrb[0].mxu0
    %v187 = vpop.f32.mrb[0].mxu0
    %v188 = vadd.f32 %v100, %v187
    %v189 = vpop.f32.mrb[0].mxu0
    %190 = vdwg.mxu0
    %v191 = vpack.c.bf16 %v188, %v185
    %v193 = vunpack.c.l.b16 %v191
    %v194 = vunpack.c.h.b16 %v191
    %v195 = vpack.c.b16 %v193, %v193
    %v196 = vpack.c.b16 %v194, %v194
    %199 = vst [vmem:[#allocation7] sm:$0xf] %v195
    %200 = vst [vmem:[#allocation7 + $0x4] sm:$0xf] %v196
    // Predicated region
    $region22: #{tpu_custom_call.1} parent=1 // pred_check
      _
    $region23: #{tpu_custom_call.1} parent=1 // pred_check_branch
      %202 = sbr.rel (0) target = $region25
    $region24: #{tpu_custom_call.1} parent=1 // pred_region
      %s204 = ssub.s32 128, 128
      %205 = vsyncadd [#allocation4], %s204
      %s206 = sshll.u32 [#allocation7], 4
      %s207 = int_to_ptr.vmem [resolvable:$true] %s206
      %212 = dma.vmem_to_hbm [thread:$0]  %s207, 128, %s3, [#allocation4], 64, 64, 4
    $region25: #{tpu_custom_call.1} parent=1 // pred_fallthru
      _
    // Predicated region
    $region26: #{tpu_custom_call.1} parent=1 // pred_check
      _
    $region27: #{tpu_custom_call.1} parent=1 // pred_check_branch
      %214 = sbr.rel (0) target = $region29
    $region28: #{tpu_custom_call.1} parent=1 // pred_region
      %215 = dma.done [#allocation4], 128
    $region29: #{tpu_custom_call.1} parent=1 // pred_fallthru
      _
    %216 = vsyncpa [#allocation3], 1
    %217 = vsyncpa [#allocation6], 1
    %218 = vsyncpa [#allocation4], 1

</llo_original>
